<compile_context>
chip_gen: v5e
topology: v5e:2x2
jax: 0.10.0
libtpu: 0.0.40
codegen_flags: <defaults>
</compile_context>

<pallas_src>
import functools
import numpy as np
import jax
import jax.numpy as jnp
from jax import lax
from jax.experimental import pallas as pl
from jax.experimental.pallas import tpu as pltpu


# =============================================================================
# Pallas conv1d kernel (stride-1 cross-correlation, im2col + one MXU matmul)
# =============================================================================
def _conv1d_kernel(x_ref, halo_ref, w_ref, o_ref, win_ref, col_ref,
                   *, taps, t_tile, halo_sz, cin2):
    # x_ref:    (1, cin2, t_tile)          bf16   main time tile
    # halo_ref: (1, 1, cin2, halo_sz)      bf16   right halo of this tile
    # w_ref:    (c_out, taps*cin2)         bf16   taps flattened k-major
    # o_ref:    (1, c_out, t_tile)         f32    lane-dense output tile
    # win_ref:  (cin2, t_tile + halo_sz)   bf16   scratch: contiguous window
    # col_ref:  (taps*cin2, t_tile)        bf16   scratch: im2col matrix

    # assemble the contiguous window = [main tile | halo]
    win_ref[:, :t_tile] = x_ref[0, :, :]
    win_ref[:, t_tile:t_tile + halo_sz] = halo_ref[0, 0, :, :]

    # im2col: stack the `taps` shifted views along the contraction (sublane) axis
    for k in range(taps):
        col_ref[k * cin2:(k + 1) * cin2, :] = win_ref[:, k:k + t_tile]

    # one MXU matmul: (c_out, taps*cin2) @ (taps*cin2, t_tile) -> f32
    acc = jnp.dot(w_ref[...], col_ref[...], preferred_element_type=jnp.float32)
    o_ref[0, :, :] = acc.astype(o_ref.dtype)


def _round_up(n, m):
    return ((n + m - 1) // m) * m


def _choose_t_tile(t_out, cin2, c_out, taps):
    """Lane-dense time tile that fits a conservative VMEM budget (v7x-safe)."""
    halo = max(taps - 1, 1)
    t_tile = max(128, min(512, _round_up(t_out, 128)))
    t_tile = max(t_tile, _round_up(halo, 128))      # halo must fit in one tile

    def footprint(tt):
        in_b = 2 * cin2 * tt * 2                    # double-buffered bf16 input
        halo_b = 2 * cin2 * halo * 2
        out_b = 2 * c_out * tt * 4                  # double-buffered f32 output
        w_b = c_out * taps * cin2 * 2
        win_b = cin2 * (tt + halo) * 2
        col_b = taps * cin2 * tt * 2
        return in_b + halo_b + out_b + w_b + win_b + col_b

    min_tile = max(128, _round_up(halo, 128))
    budget = 12 * 1024 * 1024
    while t_tile > min_tile and footprint(t_tile) > budget:
        t_tile -= 128
    return t_tile, footprint(t_tile)


@functools.partial(jax.jit, static_argnums=(2, 3))
def conv1d_pallas(x, w, stride, padding):
    """Matches torch.nn.functional.conv1d(x, w, stride=stride, padding=padding).

    x: (B, C_in, T) f32, w: (C_out, C_in, K) f32 -> (B, C_out, T_out) f32
    """
    b, c_in, t = x.shape
    c_out, c_in_w, k = w.shape
    assert c_in_w == c_in
    t_pad = t + 2 * padding
    t_out = (t_pad - k) // stride + 1
    assert t_out > 0

    # TODO(synk): the zero halo is still materialized with jnp.pad; masking the
    # edge tiles inside the kernel would save one HBM round trip of x.
    x_p = jnp.pad(x, ((0, 0), (0, 0), (padding, padding)))

    if stride > 1:
        # Polyphase decomposition -> equivalent stride-1 conv with
        # C_in' = C_in*stride channels and ceil(K/stride) taps (no strided
        # lane slices inside the kernel).
        k2 = -(-k // stride)
        w_t = jnp.pad(w, ((0, 0), (0, 0), (0, k2 * stride - k)))
        w_t = w_t.reshape(c_out, c_in, k2, stride).transpose(0, 1, 3, 2)
        w_t = w_t.reshape(c_out, c_in * stride, k2)
        t_ph = -(-t_pad // stride)
        x_p = jnp.pad(x_p, ((0, 0), (0, 0), (0, t_ph * stride - t_pad)))
        x_p = x_p.reshape(b, c_in, t_ph, stride).transpose(0, 1, 3, 2)
        x_p = x_p.reshape(b, c_in * stride, t_ph)
        cin2, taps = c_in * stride, k2
    else:
        w_t = w
        cin2, taps = c_in, k

    halo_sz = max(taps - 1, 1)
    t_tile, fp = _choose_t_tile(t_out, cin2, c_out, taps)
    n_t = -(-t_out // t_tile)
    total = n_t * t_tile + halo_sz

    # pad (or trim) the time axis to exactly n_t*t_tile + halo, cast to bf16
    cur = x_p.shape[2]
    x_full = jnp.pad(x_p, ((0, 0), (0, 0), (0, max(0, total - cur))))[:, :, :total]
    x_full = x_full.astype(jnp.bfloat16)

    # right-halo slab per time tile: halo[b, j] = x_full[b, :, (j+1)*t_tile : +halo]
    y_h = x_full[:, :, t_tile:]                       # (B, cin2, (n_t-1)*t_tile + halo)
    y_h = jnp.pad(y_h, ((0, 0), (0, 0), (0, n_t * t_tile - y_h.shape[2])))
    halo = y_h.reshape(b, cin2, n_t, t_tile)[..., :halo_sz].transpose(0, 2, 1, 3)

    # weights flattened k-major to match the im2col row order: w_flat[o, k*cin2+c]
    w_flat = w_t.transpose(0, 2, 1).reshape(c_out, taps * cin2).astype(jnp.bfloat16)

    kernel = functools.partial(_conv1d_kernel, taps=taps, t_tile=t_tile,
                               halo_sz=halo_sz, cin2=cin2)
    vmem_limit = int(min(48 * 2**20, max(32 * 2**20, 2 * fp)))

    out = pl.pallas_call(
        kernel,
        out_shape=jax.ShapeDtypeStruct((b, c_out, n_t * t_tile), jnp.float32),
        grid_spec=pltpu.PrefetchScalarGridSpec(
            num_scalar_prefetch=0,
            grid=(b, n_t),
            in_specs=[
                pl.BlockSpec((1, cin2, t_tile), lambda i, j: (i, 0, j)),
                pl.BlockSpec((1, 1, cin2, halo_sz), lambda i, j: (i, j, 0, 0)),
                pl.BlockSpec((c_out, taps * cin2), lambda i, j: (0, 0)),
            ],
            out_specs=pl.BlockSpec((1, c_out, t_tile), lambda i, j: (i, 0, j)),
            scratch_shapes=[
                pltpu.VMEM((cin2, t_tile + halo_sz), jnp.bfloat16),   # window
                pltpu.VMEM((taps * cin2, t_tile), jnp.bfloat16),      # im2col
            ],
        ),
        compiler_params=pltpu.CompilerParams(
            dimension_semantics=("parallel", "parallel"),
            vmem_limit_bytes=vmem_limit),
    )(x_full, halo, w_flat)

    return out[:, :, :t_out].astype(x.dtype)


# =============================================================================
# Module re-implementation (deterministic synthetic latent analog filters)
# =============================================================================
class SimpleLowpassContinuousFilters:
    """Deterministic stand-in for the latent analog filter bank.

    Filter f: H_f(jw) = 1 / (1 + j*w/wc_f), per-filter cutoff wc_f.
    """
    # TODO(synk): the original resolves ContFilterType from cf_module (learnable
    # analog filters); only this deterministic lowpass stand-in is provided.

    def __init__(self, n_filters, max_cutoff_hz):
        self.n_filters = n_filters
        idx = jnp.arange(1, n_filters + 1, dtype=jnp.float32)
        self.cutoffs = 2.0 * jnp.pi * max_cutoff_hz * idx / float(n_filters + 1)

    def get_frequency_responses(self, ang_freqs):
        r = ang_freqs[None, :] / self.cutoffs[:, None]
        denom = 1.0 + r * r
        return 1.0 / denom, -r / denom


class FreqRespSampConv1d:
    """SFI conv1d via frequency-domain FIR design (forward pass only)."""

    def __init__(self, in_channels, out_channels, n_samples, filter_params,
                 use_Hilbert_transforms=False):
        self.in_channels = in_channels
        self.out_channels = out_channels
        self.n_samples = n_samples
        n_filters = in_channels * out_channels
        if use_Hilbert_transforms:
            # TODO(synk): FFT-based Hilbert pairs (torch.fft.rfft/irfft) have no
            # clean Pallas equivalent; only the default (False) path is implemented.
            raise NotImplementedError("use_Hilbert_transforms not supported")
        self.use_Hilbert_transforms = use_Hilbert_transforms
        self.continuous_filters = SimpleLowpassContinuousFilters(
            n_filters=n_filters, **filter_params)
        self._weights_cache = {}

    def prepare(self, sample_rate, kernel_size, stride, padding=None):
        self.sample_rate = sample_rate
        self.kernel_size = int(kernel_size)
        self.stride = int(stride)
        if padding is None:
            self.padding = (self.kernel_size - self.stride) // 2
        else:
            self.padding = int(padding)

    # ---- FIR design (tiny; plain jnp — a pallas_call here is pure overhead) ----
    def _compute_pinvW(self):
        K = self.kernel_size
        M = self.n_samples
        P = (K - 1) // 2 if K % 2 == 1 else K // 2
        nyquist = self.sample_rate / 2.0
        ang_freqs = jnp.linspace(0.0, nyquist * 2.0 * np.pi, M).astype(jnp.float32)
        norm_w = ang_freqs / float(self.sample_rate)
        if K % 2 == 1:
            seq_P = jnp.arange(-P, P + 1, dtype=jnp.float32)[None, :]
        else:
            seq_P = jnp.arange(-(P - 1), P + 1, dtype=jnp.float32)[None, :]
        ln_W = -norm_w[:, None] * seq_P                                  # (M, K)
        W = jnp.concatenate((jnp.cos(ln_W), jnp.sin(ln_W)), axis=0)      # (2M, K)
        pinvW = jnp.linalg.pinv(W)                                       # (K, 2M)
        return ang_freqs, pinvW

    def approximate_by_FIR(self):
        ang_freqs, pinvW = self._compute_pinvW()
        resp_r, resp_i = self.continuous_filters.get_frequency_responses(ang_freqs)
        resp = jnp.concatenate((resp_r, resp_i), axis=1)                 # (F, 2M)
        fir = resp @ pinvW.T                                             # (F, K)
        return fir[:, ::-1]                                              # time reversal

    def weights(self):
        key = (self.sample_rate, self.kernel_size)
        if key not in self._weights_cache:
            filters = self.approximate_by_FIR()
            self._weights_cache[key] = filters.reshape(
                self.out_channels, self.in_channels, -1)
        return self._weights_cache[key]

    def __call__(self, x):
        w = self.weights()
        return conv1d_pallas(x, w, self.stride, self.padding)


# =============================================================================
# Reference (plain JAX) for validation
# =============================================================================
def conv1d_ref(x, w, stride, padding):
    return lax.conv_general_dilated(
        x, w, window_strides=(stride,), padding=[(padding, padding)],
        dimension_numbers=("NCH", "OIH", "NCH"),
        precision=lax.Precision.HIGHEST)


if __name__ == "__main__":
    key = jax.random.PRNGKey(0)
    batch, c_in, c_out, T = 2, 4, 4, 16

    x = jax.random.normal(key, (batch, c_in, T), dtype=jnp.float32)
    # kernel casts inputs/weights to bf16 (f32 accumulate) — compare against a
    # reference that uses the same bf16-quantized operands.
    x_q = x.astype(jnp.bfloat16).astype(jnp.float32)

    # ---- layer 1: odd kernel, stride 1 ----
    layer = FreqRespSampConv1d(
        in_channels=c_in, out_channels=c_out, n_samples=32,
        filter_params={"max_cutoff_hz": 4000.0})
    layer.prepare(sample_rate=16000, kernel_size=9, stride=1)

    y = jax.block_until_ready(layer(x))
    w = jax.block_until_ready(layer.weights())
    w_q = w.astype(jnp.bfloat16).astype(jnp.float32)
    y_ref = conv1d_ref(x_q, w_q, layer.stride, layer.padding)
    np.testing.assert_allclose(np.asarray(y), np.asarray(y_ref),
                               rtol=2e-3, atol=2e-3)
    assert y.shape == (batch, c_out, T)

    # ---- same layer, longer sequence (exercises multi-tile + halo path,
    #      and the cached weights across forward calls) ----
    x_long = jax.random.normal(jax.random.PRNGKey(1), (batch, c_in, 1000),
                               dtype=jnp.float32)
    xl_q = x_long.astype(jnp.bfloat16).astype(jnp.float32)
    y_long = jax.block_until_ready(layer(x_long))
    yl_ref = conv1d_ref(xl_q, w_q, layer.stride, layer.padding)
    np.testing.assert_allclose(np.asarray(y_long), np.asarray(yl_ref),
                               rtol=2e-3, atol=2e-3)
    assert y_long.shape == (batch, c_out, 1000)

    # ---- layer 2: even kernel, stride 2 (exercises polyphase path) ----
    layer2 = FreqRespSampConv1d(
        in_channels=c_in, out_channels=c_out, n_samples=32,
        filter_params={"max_cutoff_hz": 4000.0})
    layer2.prepare(sample_rate=16000, kernel_size=8, stride=2)
    y2 = jax.block_until_ready(layer2(x))
    w2 = jax.block_until_ready(layer2.weights())
    w2_q = w2.astype(jnp.bfloat16).astype(jnp.float32)
    y2_ref = conv1d_ref(x_q, w2_q, layer2.stride, layer2.padding)
    np.testing.assert_allclose(np.asarray(y2), np.asarray(y2_ref),
                               rtol=2e-3, atol=2e-3)

    print("KERNEL_OK")
</pallas_src>

<mosaic_0001>
module attributes {stable_mosaic.version = 11 : i64} {
  func.func @_conv1d_kernel(%arg0: i32, %arg1: i32, %arg2: memref<1x4x128xbf16, #tpu.memory_space<vmem>>, %arg3: memref<1x1x4x8xbf16, #tpu.memory_space<vmem>>, %arg4: memref<4x36xbf16, #tpu.memory_space<vmem>>, %arg5: memref<1x4x128xf32, #tpu.memory_space<vmem>>, %arg6: memref<4x136xbf16, #tpu.memory_space<vmem>>, %arg7: memref<36x128xbf16, #tpu.memory_space<vmem>>) attributes {dimension_semantics = [#tpu.dimension_semantics<parallel>, #tpu.dimension_semantics<parallel>], iteration_bounds = array<i64: 2, 1>, scalar_prefetch = 0 : i64, scratch_operands = 2 : i64, tpu.core_type = #tpu.core_type<tc>, window_params = [{transform_indices = @transform_0, window_bounds = array<i64: 1, 4, 128>}, {transform_indices = @transform_1, window_bounds = array<i64: 1, 1, 4, 8>}, {pipeline_mode = #tpu.pipeline_mode<synchronous>, transform_indices = @transform_2, window_bounds = array<i64: 4, 36>}, {transform_indices = @transform_3, window_bounds = array<i64: 1, 4, 128>}]} {
    %c0 = arith.constant 0 : index
    %c0_0 = arith.constant 0 : index
    %c0_1 = arith.constant 0 : index
    %0 = vector.load %arg2[%c0, %c0_0, %c0_1] : memref<1x4x128xbf16, #tpu.memory_space<vmem>>, vector<1x4x128xbf16>
    %1 = vector.shape_cast %0 : vector<1x4x128xbf16> to vector<4x128xbf16>
    %c0_2 = arith.constant 0 : index
    %c0_3 = arith.constant 0 : index
    %2 = vector.load %arg6[%c0_2, %c0_3] : memref<4x136xbf16, #tpu.memory_space<vmem>>, vector<4x128xbf16>
    tpu.vector_store %arg6[%c0_2, %c0_3], %1 {strides = array<i32>} : memref<4x136xbf16, #tpu.memory_space<vmem>>, vector<4x128xbf16>,
    %c0_4 = arith.constant 0 : index
    %c0_5 = arith.constant 0 : index
    %c0_6 = arith.constant 0 : index
    %c0_7 = arith.constant 0 : index
    %3 = vector.load %arg3[%c0_4, %c0_5, %c0_6, %c0_7] : memref<1x1x4x8xbf16, #tpu.memory_space<vmem>>, vector<1x1x4x8xbf16>
    %4 = vector.shape_cast %3 : vector<1x1x4x8xbf16> to vector<4x8xbf16>
    %c0_8 = arith.constant 0 : index
    %c128 = arith.constant 128 : index
    %5 = vector.load %arg6[%c0_8, %c128] : memref<4x136xbf16, #tpu.memory_space<vmem>>, vector<4x8xbf16>
    tpu.vector_store %arg6[%c0_8, %c128], %4 {strides = array<i32>} : memref<4x136xbf16, #tpu.memory_space<vmem>>, vector<4x8xbf16>,
    %c0_9 = arith.constant 0 : index
    %c0_10 = arith.constant 0 : index
    %6 = vector.load %arg6[%c0_9, %c0_10] : memref<4x136xbf16, #tpu.memory_space<vmem>>, vector<4x128xbf16>
    %c0_11 = arith.constant 0 : index
    %c0_12 = arith.constant 0 : index
    %7 = vector.load %arg7[%c0_11, %c0_12] : memref<36x128xbf16, #tpu.memory_space<vmem>>, vector<4x128xbf16>
    tpu.vector_store %arg7[%c0_11, %c0_12], %6 {strides = array<i32>} : memref<36x128xbf16, #tpu.memory_space<vmem>>, vector<4x128xbf16>,
    %c0_13 = arith.constant 0 : index
    %c1 = arith.constant 1 : index
    %8 = vector.load %arg6[%c0_13, %c1] : memref<4x136xbf16, #tpu.memory_space<vmem>>, vector<4x128xbf16>
    %c4 = arith.constant 4 : index
    %c0_14 = arith.constant 0 : index
    %9 = vector.load %arg7[%c4, %c0_14] : memref<36x128xbf16, #tpu.memory_space<vmem>>, vector<4x128xbf16>
    tpu.vector_store %arg7[%c4, %c0_14], %8 {strides = array<i32>} : memref<36x128xbf16, #tpu.memory_space<vmem>>, vector<4x128xbf16>,
    %c0_15 = arith.constant 0 : index
    %c2 = arith.constant 2 : index
    %10 = vector.load %arg6[%c0_15, %c2] : memref<4x136xbf16, #tpu.memory_space<vmem>>, vector<4x128xbf16>
    %c8 = arith.constant 8 : index
    %c0_16 = arith.constant 0 : index
    %11 = vector.load %arg7[%c8, %c0_16] : memref<36x128xbf16, #tpu.memory_space<vmem>>, vector<4x128xbf16>
    tpu.vector_store %arg7[%c8, %c0_16], %10 {strides = array<i32>} : memref<36x128xbf16, #tpu.memory_space<vmem>>, vector<4x128xbf16>,
    %c0_17 = arith.constant 0 : index
    %c3 = arith.constant 3 : index
    %12 = vector.load %arg6[%c0_17, %c3] : memref<4x136xbf16, #tpu.memory_space<vmem>>, vector<4x128xbf16>
    %c12 = arith.constant 12 : index
    %c0_18 = arith.constant 0 : index
    %13 = vector.load %arg7[%c12, %c0_18] : memref<36x128xbf16, #tpu.memory_space<vmem>>, vector<4x128xbf16>
    tpu.vector_store %arg7[%c12, %c0_18], %12 {strides = array<i32>} : memref<36x128xbf16, #tpu.memory_space<vmem>>, vector<4x128xbf16>,
    %c0_19 = arith.constant 0 : index
    %c4_20 = arith.constant 4 : index
    %14 = vector.load %arg6[%c0_19, %c4_20] : memref<4x136xbf16, #tpu.memory_space<vmem>>, vector<4x128xbf16>
    %c16 = arith.constant 16 : index
    %c0_21 = arith.constant 0 : index
    %15 = vector.load %arg7[%c16, %c0_21] : memref<36x128xbf16, #tpu.memory_space<vmem>>, vector<4x128xbf16>
    tpu.vector_store %arg7[%c16, %c0_21], %14 {strides = array<i32>} : memref<36x128xbf16, #tpu.memory_space<vmem>>, vector<4x128xbf16>,
    %c0_22 = arith.constant 0 : index
    %c5 = arith.constant 5 : index
    %16 = vector.load %arg6[%c0_22, %c5] : memref<4x136xbf16, #tpu.memory_space<vmem>>, vector<4x128xbf16>
    %c20 = arith.constant 20 : index
    %c0_23 = arith.constant 0 : index
    %17 = vector.load %arg7[%c20, %c0_23] : memref<36x128xbf16, #tpu.memory_space<vmem>>, vector<4x128xbf16>
    tpu.vector_store %arg7[%c20, %c0_23], %16 {strides = array<i32>} : memref<36x128xbf16, #tpu.memory_space<vmem>>, vector<4x128xbf16>,
    %c0_24 = arith.constant 0 : index
    %c6 = arith.constant 6 : index
    %18 = vector.load %arg6[%c0_24, %c6] : memref<4x136xbf16, #tpu.memory_space<vmem>>, vector<4x128xbf16>
    %c24 = arith.constant 24 : index
    %c0_25 = arith.constant 0 : index
    %19 = vector.load %arg7[%c24, %c0_25] : memref<36x128xbf16, #tpu.memory_space<vmem>>, vector<4x128xbf16>
    tpu.vector_store %arg7[%c24, %c0_25], %18 {strides = array<i32>} : memref<36x128xbf16, #tpu.memory_space<vmem>>, vector<4x128xbf16>,
    %c0_26 = arith.constant 0 : index
    %c7 = arith.constant 7 : index
    %20 = vector.load %arg6[%c0_26, %c7] : memref<4x136xbf16, #tpu.memory_space<vmem>>, vector<4x128xbf16>
    %c28 = arith.constant 28 : index
    %c0_27 = arith.constant 0 : index
    %21 = vector.load %arg7[%c28, %c0_27] : memref<36x128xbf16, #tpu.memory_space<vmem>>, vector<4x128xbf16>
    tpu.vector_store %arg7[%c28, %c0_27], %20 {strides = array<i32>} : memref<36x128xbf16, #tpu.memory_space<vmem>>, vector<4x128xbf16>,
    %c0_28 = arith.constant 0 : index
    %c8_29 = arith.constant 8 : index
    %22 = vector.load %arg6[%c0_28, %c8_29] : memref<4x136xbf16, #tpu.memory_space<vmem>>, vector<4x128xbf16>
    %c32 = arith.constant 32 : index
    %c0_30 = arith.constant 0 : index
    %23 = vector.load %arg7[%c32, %c0_30] : memref<36x128xbf16, #tpu.memory_space<vmem>>, vector<4x128xbf16>
    tpu.vector_store %arg7[%c32, %c0_30], %22 {strides = array<i32>} : memref<36x128xbf16, #tpu.memory_space<vmem>>, vector<4x128xbf16>,
    %c0_31 = arith.constant 0 : index
    %c0_32 = arith.constant 0 : index
    %24 = vector.load %arg4[%c0_31, %c0_32] : memref<4x36xbf16, #tpu.memory_space<vmem>>, vector<4x36xbf16>
    %c0_33 = arith.constant 0 : index
    %c0_34 = arith.constant 0 : index
    %25 = vector.load %arg7[%c0_33, %c0_34] : memref<36x128xbf16, #tpu.memory_space<vmem>>, vector<36x128xbf16>
    %cst = arith.constant dense<0.000000e+00> : vector<4x128xf32>
    %26 = tpu.matmul %24, %25, %cst {dimension_numbers = #tpu.dot_dimension_numbers<[1], [0], [0], [1], [0, 0, 1, 1], [], []>} : vector<4x36xbf16>, vector<36x128xbf16>, vector<4x128xf32> -> vector<4x128xf32>
    %c0_35 = arith.constant 0 : index
    %c0_36 = arith.constant 0 : index
    %c0_37 = arith.constant 0 : index
    %27 = vector.load %arg5[%c0_35, %c0_36, %c0_37] : memref<1x4x128xf32, #tpu.memory_space<vmem>>, vector<1x4x128xf32>
    %28 = vector.shape_cast %27 : vector<1x4x128xf32> to vector<4x128xf32>
    %29 = vector.shape_cast %26 : vector<4x128xf32> to vector<1x4x128xf32>
    tpu.vector_store %arg5[%c0_35, %c0_36, %c0_37], %29 {strides = array<i32>} : memref<1x4x128xf32, #tpu.memory_space<vmem>>, vector<1x4x128xf32>,
    return
  }
  func.func @transform_0(%arg0: i32, %arg1: i32) -> (i32, i32, i32) {
    %c0_i32 = arith.constant 0 : i32
    %c0_i32_0 = arith.constant 0 : i32
    return %arg0, %c0_i32, %arg1 : i32, i32, i32
  }
  func.func @transform_1(%arg0: i32, %arg1: i32) -> (i32, i32, i32, i32) {
    %c0_i32 = arith.constant 0 : i32
    %c0_i32_0 = arith.constant 0 : i32
    %c0_i32_1 = arith.constant 0 : i32
    return %arg0, %arg1, %c0_i32, %c0_i32_0 : i32, i32, i32, i32
  }
  func.func @transform_2(%arg0: i32, %arg1: i32) -> (i32, i32) {
    %c0_i32 = arith.constant 0 : i32
    %c0_i32_0 = arith.constant 0 : i32
    %c0_i32_1 = arith.constant 0 : i32
    return %c0_i32, %c0_i32_0 : i32, i32
  }
  func.func @transform_3(%arg0: i32, %arg1: i32) -> (i32, i32, i32) {
    %c0_i32 = arith.constant 0 : i32
    %c0_i32_0 = arith.constant 0 : i32
    return %arg0, %c0_i32, %arg1 : i32, i32, i32
  }
}

</mosaic_0001>

<llo_original>
// kernel: conv1d_pallas.1
$region0: #{conv1d_pallas.1}
  #allocation0 [shape = 'u32[]', space=smem, size = 0x4, offset = 0x4, fixed_abs, tag = 'smem constant byte address 0x4 - core index']
  #allocation1 [shape = 'u32[72,128]{1,0:T(1,128)}', space=vmem, size = 0x9000, scoped, tag = 'internal scratch']
  #allocation2 [shape = 'bf16[4,136]{1,0:T(4,128)(2,1)}', space=vmem, size = 0x800, scoped, tag = 'scratch operand']
  #allocation3 [shape = 'bf16[36,128]{1,0:T(8,128)(2,1)}', space=vmem, size = 0x2800, scoped, tag = 'scratch operand']
  %s0 = inlined_call_operand.vmem [shape: bf16[2,4,136], index: 0, kind: input, shape index: {}]
  %s1 = inlined_call_operand.vmem [shape: bf16[2,1,4,8], index: 1, kind: input, shape index: {}]
  %s2 = inlined_call_operand.vmem [shape: bf16[4,36], index: 2, kind: input, shape index: {}]
  %s3 = inlined_call_operand.hbm [shape: f32[2,4,128], index: 3, kind: output, shape index: {}]
  %s4 = sld [smem:[#allocation0]]
  $region45: #{conv1d_pallas.1} parent=0
    _
  %s6 = ssub.s32 1, %s4
  %s7 = scalar_select 0, %s6, %s4
  $region1: #{conv1d_pallas.1} parent=0
    #allocation4 [shape = 'u8[4096]{0}', space=vmem, size = 0x1000, scoped, tag = 'output window, operand 0']
    #allocation5 [shape = 's32[2]{0}', space=sflag, size = 0x8, scoped, tag = 'scoped memory for conv1d_pallas.1']
    %8 = vsyncpa [#allocation5], 0
    %s9 = scalar_lea.sflag [#allocation5], 1
    %10 = vsyncpa %s9, 0
    loop: start=0, step=1, limit=4
    $region2: #{conv1d_pallas.1} parent=1 // loop_pre_header
      _
    $region3: #{conv1d_pallas.1} parent=1 // loop_header
      %s12 = sphi 0, %s16
      %p13 = scmp.ge.s32.totalorder %s12, 4
      %s19 = sphi 0, %s31
      %s20 = sphi 0, %s27
      %s21 = sphi 0, %s19
      %s22 = sphi 0, %s20
      %s23 = sphi 0, %s21
      %s24 = sphi 0, %s22
      %s36 = sphi 0, %s38
      %s39 = sphi 0, %s36
      %s40 = sphi 0, %s39
      %s56 = sphi 0, %s40
      %s64 = sphi 0, %s66
      %s67 = sphi 0, %s64
      %s68 = sphi 0, %s67
      %s84 = sphi 0, %s68
      %s88 = sphi 0, %s88
      %s90 = sphi 0, %s88
      %s91 = sphi 0, %s90
      %s105 = sphi 0, %s91
      %s113 = sphi 0, %s115
      %s116 = sphi 0, %s113
      %s117 = sphi 0, %s116
      %s133 = sphi 0, %s117
    $region4: #{conv1d_pallas.1} parent=1 // loop_header_branch
      %15 = sbr.rel (%p13) target = $region8
    $region5: #{conv1d_pallas.1} parent=1 // loop_body
      %s17 = ssub.s32 %s12, 1
      %s18 = ssub.s32 %s12, 2
      %s25 = sadd.s32 1, %s20
      %p26 = scmp.ge.s32.totalorder %s25, 1
      %s27 = scalar_select %p26, 0, %s25
      %s28 = sadd.s32 1, %s19
      %s29 = scalar_select %p26, %s28, %s19
      %p30 = scmp.ge.s32.totalorder %s29, 2
      %s31 = scalar_select %p30, 0, %s29
      %s32 = ssub.s32 %s19, %s31
      %s33 = ssub.s32 %s20, %s27
      %s34 = sor.u32 %s32, %s33
      %p35 = scmp.eq.s32.totalorder %s34, 0
      %s37 = sadd.s32 %s36, 1
      %s38 = scalar_select %p35, %s36, %s37
      %p41 = pneg %p35
      %p42 = scmp.eq.s32.totalorder %s12, 1
      %p43 = por %p41, %p42
      %p44 = scmp.ne.s32.totalorder %s36, %s39
      %p45 = scmp.eq.s32.totalorder %s12, 0
      %p46 = por %p44, %p45
      %p47 = scmp.ne.s32.totalorder %s36, %s39
      %p48 = scmp.eq.s32.totalorder %s17, 1
      %p49 = por %p47, %p48
      %p50 = scmp.ne.s32.totalorder %s39, %s40
      %p51 = scmp.eq.s32.totalorder %s17, 0
      %p52 = por %p50, %p51
      %p53 = scmp.ne.s32.totalorder %s39, %s40
      %p54 = scmp.eq.s32.totalorder %s18, 1
      %p55 = por %p53, %p54
      %p57 = scmp.ne.s32.totalorder %s40, %s56
      %p58 = scmp.eq.s32.totalorder %s18, 0
      %p59 = por %p57, %p58
      %s60 = ssub.s32 %s19, %s31
      %s61 = ssub.s32 %s20, %s27
      %s62 = sor.u32 %s60, %s61
      %p63 = scmp.eq.s32.totalorder %s62, 0
      %s65 = sadd.s32 %s64, 1
      %s66 = scalar_select %p63, %s64, %s65
      %p69 = pneg %p63
      %p70 = scmp.eq.s32.totalorder %s12, 1
      %p71 = por %p69, %p70
      %p72 = scmp.ne.s32.totalorder %s64, %s67
      %p73 = scmp.eq.s32.totalorder %s12, 0
      %p74 = por %p72, %p73
      %p75 = scmp.ne.s32.totalorder %s64, %s67
      %p76 = scmp.eq.s32.totalorder %s17, 1
      %p77 = por %p75, %p76
      %p78 = scmp.ne.s32.totalorder %s67, %s68
      %p79 = scmp.eq.s32.totalorder %s17, 0
      %p80 = por %p78, %p79
      %p81 = scmp.ne.s32.totalorder %s67, %s68
      %p82 = scmp.eq.s32.totalorder %s18, 1
      %p83 = por %p81, %p82
      %p85 = scmp.ne.s32.totalorder %s68, %s84
      %p86 = scmp.eq.s32.totalorder %s18, 0
      %p87 = por %p85, %p86
      %s89 = sadd.s32 %s88, 1
      %p92 = scmp.eq.s32.totalorder %s12, 1
      %p93 = scmp.ne.s32.totalorder %s88, %s90
      %p94 = scmp.eq.s32.totalorder %s12, 0
      %p95 = por %p93, %p94
      %p96 = scmp.ne.s32.totalorder %s88, %s90
      %p97 = scmp.eq.s32.totalorder %s17, 1
      %p98 = por %p96, %p97
      %p99 = scmp.ne.s32.totalorder %s90, %s91
      %p100 = scmp.eq.s32.totalorder %s17, 0
      %p101 = por %p99, %p100
      %p102 = scmp.ne.s32.totalorder %s90, %s91
      %p103 = scmp.eq.s32.totalorder %s18, 1
      %p104 = por %p102, %p103
      %p106 = scmp.ne.s32.totalorder %s91, %s105
      %p107 = scmp.eq.s32.totalorder %s18, 0
      %p108 = por %p106, %p107
      %s109 = ssub.s32 %s19, %s31
      %s110 = ssub.s32 %s20, %s27
      %s111 = sor.u32 %s109, %s110
      %p112 = scmp.eq.s32.totalorder %s111, 0
      %s114 = sadd.s32 %s113, 1
      %s115 = scalar_select %p112, %s113, %s114
      %p118 = pneg %p112
      %p119 = scmp.eq.s32.totalorder %s12, 1
      %p120 = por %p118, %p119
      %p121 = scmp.ne.s32.totalorder %s113, %s116
      %p122 = scmp.eq.s32.totalorder %s12, 0
      %p123 = por %p121, %p122
      %p124 = scmp.ne.s32.totalorder %s113, %s116
      %p125 = scmp.eq.s32.totalorder %s17, 1
      %p126 = por %p124, %p125
      %p127 = scmp.ne.s32.totalorder %s116, %s117
      %p128 = scmp.eq.s32.totalorder %s17, 0
      %p129 = por %p127, %p128
      %p130 = scmp.ne.s32.totalorder %s116, %s117
      %p131 = scmp.eq.s32.totalorder %s18, 1
      %p132 = por %p130, %p131
      %p134 = scmp.ne.s32.totalorder %s117, %s133
      %p135 = scmp.eq.s32.totalorder %s18, 0
      %p136 = por %p134, %p135
      %p137 = scmp.le.s32.totalorder 1, %s12
      %p138 = scmp.lt.s32.totalorder %s12, 3
      %p139 = pnand %p137, %p138
      %p140 = pneg %p139
      // Predicated region
      $region9: #{conv1d_pallas.1} parent=5 // pred_check
        _
      $region10: #{conv1d_pallas.1} parent=5 // pred_check_branch
        %142 = sbr.rel (%p139) target = $region12
      $region11: #{conv1d_pallas.1} parent=5 // pred_region
        %s143 = ssub.s32 %s12, 1
        // Predicated region
        $region13: #{conv1d_pallas.1} parent=11 // pred_check
          %p144 = pneg %p101
        $region14: #{conv1d_pallas.1} parent=11 // pred_check_branch
          %146 = sbr.rel (%p144) target = $region16
        $region15: #{conv1d_pallas.1} parent=11 // pred_region
          _
        $region16: #{conv1d_pallas.1} parent=11 // pred_fallthru
          _
      $region12: #{conv1d_pallas.1} parent=5 // pred_fallthru
        _
      %p147 = scmp.lt.s32.totalorder %s12, 2
      // Predicated region
      $region17: #{conv1d_pallas.1} parent=5 // pred_check
        %p148 = pneg %p147
      $region18: #{conv1d_pallas.1} parent=5 // pred_check_branch
        %150 = sbr.rel (%p148) target = $region20
      $region19: #{conv1d_pallas.1} parent=5 // pred_region
        // Predicated region
        $region21: #{conv1d_pallas.1} parent=19 // pred_check
          %p151 = pneg %p46
        $region22: #{conv1d_pallas.1} parent=19 // pred_check_branch
          %153 = sbr.rel (%p151) target = $region24
        $region23: #{conv1d_pallas.1} parent=19 // pred_region
          %p154 = scmp.lt.s32.totalorder %s19, 1
          %s155 = scalar_select %p154, %s19, 1
          %p156 = scmp.lt.s32.totalorder %s20, 1
          %s157 = scalar_select %p156, %s20, 1
          %s158 = smul.addr %s155, 2
          %s159 = sadd.s32 %s157, %s158
          %s160 = smul.addr %s159, 2
          %s161 = scalar_lea.vmem %s0, %s160
        $region24: #{conv1d_pallas.1} parent=19 // pred_fallthru
          _
        // Predicated region
        $region25: #{conv1d_pallas.1} parent=19 // pred_check
          %p162 = pneg %p74
        $region26: #{conv1d_pallas.1} parent=19 // pred_check_branch
          %164 = sbr.rel (%p162) target = $region28
        $region27: #{conv1d_pallas.1} parent=19 // pred_region
          %p165 = scmp.lt.s32.totalorder %s19, 1
          %s166 = scalar_select %p165, %s19, 1
          %p167 = scmp.lt.s32.totalorder %s20, 0
          %s168 = scalar_select %p167, %s20, 0
          %s169 = sadd.s32 %s168, %s166
          %s170 = smul.addr %s169, 2
          %s171 = scalar_lea.vmem %s1, %s170
        $region28: #{conv1d_pallas.1} parent=19 // pred_fallthru
          _
      $region20: #{conv1d_pallas.1} parent=5 // pred_fallthru
        _
      %p172 = scmp.le.s32.totalorder 1, %s12
      %p173 = scmp.lt.s32.totalorder %s12, 3
      %p174 = pnand %p172, %p173
      %p175 = pneg %p174
      // Predicated region
      $region29: #{conv1d_pallas.1} parent=5 // pred_check
        _
      $region30: #{conv1d_pallas.1} parent=5 // pred_check_branch
        %177 = sbr.rel (%p174) target = $region32
      $region31: #{conv1d_pallas.1} parent=5 // pred_region
        %s178 = ssub.s32 %s12, 1
        %p179 = scmp.lt.s32.totalorder %s21, 1
        %s180 = scalar_select %p179, %s21, 1
        %p181 = scmp.lt.s32.totalorder %s22, 1
        %s182 = scalar_select %p181, %s22, 1
        %s183 = smul.addr %s180, 2
        %s184 = sadd.s32 %s182, %s183
        %s185 = smul.addr %s184, 2
        %s186 = scalar_lea.vmem %s0, %s185
        %p187 = pneg %p52
        %p188 = pneg %p49
        %p189 = scmp.lt.s32.totalorder %s21, 1
        %s190 = scalar_select %p189, %s21, 1
        %p191 = scmp.lt.s32.totalorder %s22, 0
        %s192 = scalar_select %p191, %s22, 0
        %s193 = sadd.s32 %s192, %s190
        %s194 = smul.addr %s193, 2
        %s195 = scalar_lea.vmem %s1, %s194
        %p196 = pneg %p80
        %p197 = pneg %p77
        %p198 = pneg %p101
        %p199 = pneg %p98
        %p200 = pneg %p129
        %p201 = pneg %p126
        %s202 = sand.u32 %s116, 1
        %s203 = scalar_lea.sflag [#allocation5], %s202
        %s204 = sand.u32 %s116, 1
        %s205 = smul.addr %s204, 4
        %s206 = scalar_lea.vmem [#allocation4], %s205
        %p207 = scmp.lt.s32.totalorder %s21, 1
        %s208 = scalar_select %p207, %s21, 1
        %p209 = scmp.lt.s32.totalorder %s22, 1
        %s210 = scalar_select %p209, %s22, 1
        %s211 = smul.addr %s208, 2
        %s212 = sadd.s32 %s210, %s211
        %s213 = smul.addr %s212, 2
        %s214 = scalar_lea.vmem %s0, %s213
        %p215 = scmp.lt.s32.totalorder %s21, 1
        %s216 = scalar_select %p215, %s21, 1
        %p217 = scmp.lt.s32.totalorder %s22, 0
        %s218 = scalar_select %p217, %s22, 0
        %s219 = sadd.s32 %s218, %s216
        %s220 = smul.addr %s219, 2
        %s221 = scalar_lea.vmem %s1, %s220
        %v223 = vld [vmem:[%s214] sm:$0x3]
        %224 = vst [vmem:[#allocation2] sm:$0x3] %v223
        %v225 = vld [vmem:[%s221] sm:$0x3]
        %vm226 = vcmask 58368
        %227 = vst.msk [vmem:[#allocation2 + $0x2] sm:$0x3] %vm226, %v225
        %v228 = vld [vmem:[#allocation2] sm:$0x3]
        %229 = vst [vmem:[#allocation3] sm:$0x3] %v228
        %v230 = vld [vmem:[#allocation2] sm:$0xf]
        %s232 = scalar_lea.vmem [#allocation1], 1
        %233 = vst [vmem:[%s232] ss:$2 sm:$0xff] %v230
        %v234 = vld.sshfl [vmem:[#allocation1] sm:$0xff pattern:$0x75643120]
        %236 = vrot.lane.b32.xlu0 %v234, 127
        %v237 = vpop.permute.xlu0 %236
        %v238 = vrot.slane %v237, 4
        %vm239 = vcmask 1039360
        %v240 = vsel %vm239, %v237, %v238
        %242 = vst [vmem:[#allocation3] sm:$0xc] %v240
        %v243 = vld [vmem:[#allocation2] sm:$0xf]
        %245 = vst [vmem:[#allocation1] ss:$2 sm:$0xff] %v243
        %v246 = vld.sshfl [vmem:[#allocation1] sm:$0xff pattern:$0x75643120]
        %248 = vrot.lane.b32.xlu0 %v246, 126
        %v249 = vpop.permute.xlu0 %248
        %v250 = vrot.slane %v249, 4
        %vm251 = vcmask 1031168
        %v252 = vsel %vm251, %v249, %v250
        %254 = vst [vmem:[#allocation3 + $0x4] sm:$0x3] %v252
        %v255 = vld [vmem:[#allocation2] sm:$0xf]
        %s257 = scalar_lea.vmem [#allocation1], 1
        %258 = vst [vmem:[%s257] ss:$2 sm:$0xff] %v255
        %v259 = vld.sshfl [vmem:[#allocation1] sm:$0xff pattern:$0x75643120]
        %261 = vrot.lane.b32.xlu0 %v259, 125
        %v262 = vpop.permute.xlu0 %261
        %v263 = vrot.slane %v262, 4
        %vm264 = vcmask 1022976
        %v265 = vsel %vm264, %v262, %v263
        %267 = vst [vmem:[#allocation3 + $0x4] sm:$0xc] %v265
        %v268 = vld [vmem:[#allocation2] sm:$0xf]
        %270 = vst [vmem:[#allocation1] ss:$2 sm:$0xff] %v268
        %v271 = vld.sshfl [vmem:[#allocation1] sm:$0xff pattern:$0x75643120]
        %273 = vrot.lane.b32.xlu0 %v271, 124
        %v274 = vpop.permute.xlu0 %273
        %v275 = vrot.slane %v274, 4
        %vm276 = vcmask 1014784
        %v277 = vsel %vm276, %v274, %v275
        %279 = vst [vmem:[#allocation3 + $0x8] sm:$0x3] %v277
        %v280 = vld [vmem:[#allocation2] sm:$0xf]
        %s282 = scalar_lea.vmem [#allocation1], 1
        %283 = vst [vmem:[%s282] ss:$2 sm:$0xff] %v280
        %v284 = vld.sshfl [vmem:[#allocation1] sm:$0xff pattern:$0x75643120]
        %286 = vrot.lane.b32.xlu0 %v284, 123
        %v287 = vpop.permute.xlu0 %286
        %v288 = vrot.slane %v287, 4
        %vm289 = vcmask 1006592
        %v290 = vsel %vm289, %v287, %v288
        %292 = vst [vmem:[#allocation3 + $0x8] sm:$0xc] %v290
        %v293 = vld [vmem:[#allocation2] sm:$0xf]
        %295 = vst [vmem:[#allocation1] ss:$2 sm:$0xff] %v293
        %v296 = vld.sshfl [vmem:[#allocation1] sm:$0xff pattern:$0x75643120]
        %298 = vrot.lane.b32.xlu0 %v296, 122
        %v299 = vpop.permute.xlu0 %298
        %v300 = vrot.slane %v299, 4
        %vm301 = vcmask 998400
        %v302 = vsel %vm301, %v299, %v300
        %304 = vst [vmem:[#allocation3 + $0xc] sm:$0x3] %v302
        %v305 = vld [vmem:[#allocation2] sm:$0xf]
        %s307 = scalar_lea.vmem [#allocation1], 1
        %308 = vst [vmem:[%s307] ss:$2 sm:$0xff] %v305
        %v309 = vld.sshfl [vmem:[#allocation1] sm:$0xff pattern:$0x75643120]
        %311 = vrot.lane.b32.xlu0 %v309, 121
        %v312 = vpop.permute.xlu0 %311
        %v313 = vrot.slane %v312, 4
        %vm314 = vcmask 990208
        %v315 = vsel %vm314, %v312, %v313
        %317 = vst [vmem:[#allocation3 + $0xc] sm:$0xc] %v315
        %v318 = vld [vmem:[#allocation2] sm:$0xf]
        %320 = vst [vmem:[#allocation1] ss:$2 sm:$0xff] %v318
        %v321 = vld.sshfl [vmem:[#allocation1] sm:$0xff pattern:$0x75643120]
        %323 = vrot.lane.b32.xlu0 %v321, 120
        %v324 = vpop.permute.xlu0 %323
        %v325 = vrot.slane %v324, 4
        %vm326 = vcmask 982016
        %v327 = vsel %vm326, %v324, %v325
        %329 = vst [vmem:[#allocation3 + $0x10] sm:$0x3] %v327
        %v330 = vld [vmem:[%s2] sm:$0x3]
        %v331 = vld [vmem:[#allocation3] sm:$0xf]
        %v332 = vld [vmem:[#allocation3 + $0x4] sm:$0xf]
        %v333 = vld [vmem:[#allocation3 + $0x8] sm:$0xf]
        %v334 = vld [vmem:[#allocation3 + $0xc] sm:$0xf]
        %v335 = vld [vmem:[#allocation3 + $0x10] sm:$0x3]
        %v341 = vunpack.c.l.b16 %v331
        %v342 = vunpack.c.l.b16 %v332
        %v343 = vunpack.c.l.b16 %v333
        %v344 = vunpack.c.l.b16 %v334
        %v345 = vunpack.c.l.b16 %v335
        %v346 = vpack.c.b16 %v342, %v341
        %v347 = vpack.c.b16 %v344, %v343
        %v348 = vpack.c.b16 %v345, %v345
        %vm351 = vcmask 293888
        %v353 = vsel %vm351, %v330, 0
        %vm355 = vcmask 1041408
        %v357 = vsel %vm355, %v348, 0
        %359 = vmatpush.bf16.msra.mxu0 0
        %360 = vmatpush.bf16.msra.mxu0 0
        %361 = vmatpush.bf16.msra.mxu0 0
        %362 = vmatpush.bf16.msra.mxu0 0
        %363 = vmatpush.bf16.msra.mxu0 0
        %364 = vmatpush.bf16.msra.mxu0 %v357
        %365 = vmatpush.bf16.msra.mxu0 %v347
        %366 = vmatpush.bf16.msra.mxu0 %v346
        %367 = vmatmul.bf16.gmra.mxu0 %v353
        %v368 = vpop.f32.mrf.mxu0
        %v369 = vadd.f32 0.0, %v368
        %v370 = vpop.f32.mrf.mxu0
        %371 = vdwg.mxu0
        %372 = vst [vmem:[%s206] sm:$0xf] %v369
        %s373 = sand.u32 %s116, 1
        %s374 = scalar_lea.sflag [#allocation5], %s373
        %s375 = sand.u32 %s116, 1
        %s376 = smul.addr %s375, 4
        %s377 = scalar_lea.vmem [#allocation4], %s376
        // Predicated region
        $region33: #{conv1d_pallas.1} parent=31 // pred_check
          %p378 = pneg %p126
        $region34: #{conv1d_pallas.1} parent=31 // pred_check_branch
          %380 = sbr.rel (%p378) target = $region36
        $region35: #{conv1d_pallas.1} parent=31 // pred_region
          %382 = vsyncadd %s374, 0
          %s383 = sadd.s32 %s22, %s21
          %s384 = smul.addr %s383, 4
          %s385 = scalar_lea.hbm %s3, %s384
          %s387 = sshll.u32 %s377, 4
          %s388 = int_to_ptr.vmem [resolvable:$true] %s387
          %s389 = sshll.u32 %s385, 4
          %s390 = int_to_ptr.hbm [resolvable:$true] %s389
          %392 = dma.vmem_to_hbm [thread:$0]  %s388, 64, %s390, %s374
        $region36: #{conv1d_pallas.1} parent=31 // pred_fallthru
          _
      $region32: #{conv1d_pallas.1} parent=5 // pred_fallthru
        _
      %p393 = scmp.le.s32.totalorder 2, %s12
      // Predicated region
      $region37: #{conv1d_pallas.1} parent=5 // pred_check
        %p394 = pneg %p393
      $region38: #{conv1d_pallas.1} parent=5 // pred_check_branch
        %396 = sbr.rel (%p394) target = $region40
      $region39: #{conv1d_pallas.1} parent=5 // pred_region
        %s397 = ssub.s32 %s12, 2
        // Predicated region
        $region41: #{conv1d_pallas.1} parent=39 // pred_check
          %p398 = pneg %p132
        $region42: #{conv1d_pallas.1} parent=39 // pred_check_branch
          %400 = sbr.rel (%p398) target = $region44
        $region43: #{conv1d_pallas.1} parent=39 // pred_region
          %s401 = sand.u32 %s117, 1
          %s402 = scalar_lea.sflag [#allocation5], %s401
          %s403 = sand.u32 %s117, 1
          %s404 = smul.addr %s403, 4
          %s405 = scalar_lea.vmem [#allocation4], %s404
          %407 = dma.done %s402, 64
        $region44: #{conv1d_pallas.1} parent=39 // pred_fallthru
          _
      $region40: #{conv1d_pallas.1} parent=5 // pred_fallthru
        _
    $region6: #{conv1d_pallas.1} parent=1 // loop_footer
      %s16 = sadd.s32 1, %s12
    $region7: #{conv1d_pallas.1} parent=1 // loop_footer_branch
      %11 = sbr.rel target = $region3
    $region8: #{conv1d_pallas.1} parent=1 // loop_exit
      _
    %408 = vsyncpa [#allocation5], 1
    %s409 = scalar_lea.sflag [#allocation5], 1
    %410 = vsyncpa %s409, 1

</llo_original>
